<compile_context>
chip_gen: v5e
topology: v5e:2x2
jax: 0.10.0
libtpu: 0.0.40
codegen_flags: <defaults>
</compile_context>

<pallas_src>
import jax
import jax.numpy as jnp
from jax.experimental import pallas as pl
from jax.experimental.pallas import tpu as pltpu

W1_DIM = 512  # "w1" in the reference module


def _round_up(n, m):
    return ((n + m - 1) // m) * m


def _mlp_kernel(x_ref,
                w1_ref, b1_ref,
                w2_ref, b2_ref,
                w3_ref, b3_ref,
                w4_ref, b4_ref,
                w5_ref, b5_ref,
                w6_ref, b6_ref,
                o_ref):
    """Fused 6-layer MLP with ReLU between layers on one (TILE_B, F) batch tile."""
    x = x_ref[...]

    def linear(h, w_ref, b_ref):
        # MXU matmul with f32 accumulation; bias broadcast on the VPU.
        return jnp.dot(h, w_ref[...], preferred_element_type=jnp.float32) + b_ref[...]

    h = jnp.maximum(linear(x, w1_ref, b1_ref), 0.0)   # Linear(input_dim, 64) + ReLU
    h = jnp.maximum(linear(h, w2_ref, b2_ref), 0.0)   # Linear(64, 512) + ReLU
    h = jnp.maximum(linear(h, w3_ref, b3_ref), 0.0)   # Linear(512, bottle) + ReLU
    h = jnp.maximum(linear(h, w4_ref, b4_ref), 0.0)   # Linear(bottle, 512) + ReLU
    h = jnp.maximum(linear(h, w5_ref, b5_ref), 0.0)   # Linear(512, 64) + ReLU
    y = linear(h, w6_ref, b6_ref)                     # Linear(64, input_dim)

    o_ref[...] = y.astype(o_ref.dtype)


def init_params(key, input_dim, bottle_dim, dtype=jnp.float32):
    """Deterministic parameter init (Kaiming-uniform-like, same shapes as nn.Linear)."""
    dims = [input_dim, 64, W1_DIM, bottle_dim, W1_DIM, 64, input_dim]
    params = []
    for i in range(6):
        fan_in, fan_out = dims[i], dims[i + 1]
        key, kw, kb = jax.random.split(key, 3)
        bound = 1.0 / jnp.sqrt(jnp.asarray(fan_in, dtype=jnp.float32))
        # Stored as (in, out) = transpose of PyTorch's (out, in) weight.
        w = jax.random.uniform(kw, (fan_in, fan_out), dtype, -bound, bound)
        b = jax.random.uniform(kb, (1, fan_out), dtype, -bound, bound)
        params.append((w, b))
    return params


def neural_network2_forward(x, params, tile_b=512):
    """Pallas equivalent of NeuralNetwork2.forward: returns (y, zeros(1))."""
    batch, input_dim = x.shape
    bottle_dim = params[2][0].shape[1]

    # Batch tile: multiple of 8, capped at tile_b; pad batch to a multiple of it.
    tb = min(tile_b, _round_up(batch, 8))
    padded = _round_up(batch, tb)
    x_in = x
    if padded != batch:
        x_in = jnp.pad(x, ((0, padded - batch), (0, 0)))
    grid = (padded // tb,)

    flat = []
    # x / out: tiled along the batch; weights & biases: constant block index
    # -> DMA'd once and kept VMEM-resident across all grid steps.
    in_specs = [pl.BlockSpec((tb, input_dim), lambda i: (i, 0))]
    for w, b in params:
        flat.extend([w, b])
        in_specs.append(pl.BlockSpec(w.shape, lambda i: (0, 0)))
        in_specs.append(pl.BlockSpec(b.shape, lambda i: (0, 0)))

    itemsize = jnp.dtype(x.dtype).itemsize
    flops = 2 * padded * (input_dim * 64 + 64 * W1_DIM + W1_DIM * bottle_dim
                          + bottle_dim * W1_DIM + W1_DIM * 64 + 64 * input_dim)
    param_bytes = sum(w.size * jnp.dtype(w.dtype).itemsize
                      + b.size * jnp.dtype(b.dtype).itemsize for w, b in params)
    bytes_accessed = 2 * padded * input_dim * itemsize + param_bytes

    y = pl.pallas_call(
        _mlp_kernel,
        out_shape=jax.ShapeDtypeStruct((padded, input_dim), x.dtype),
        grid=grid,
        in_specs=in_specs,
        out_specs=pl.BlockSpec((tb, input_dim), lambda i: (i, 0)),
        compiler_params=pltpu.CompilerParams(
            dimension_semantics=("parallel",)),
        cost_estimate=pl.CostEstimate(flops=flops, transcendentals=0,
                                      bytes_accessed=bytes_accessed),
    )(x_in, *flat)

    if padded != batch:
        y = y[:batch]
    return y, jnp.zeros((1,), dtype=x.dtype)


def _reference(x, params):
    h = x
    for i, (w, b) in enumerate(params):
        h = h @ w + b
        if i < 5:
            h = jnp.maximum(h, 0.0)
    return h


if __name__ == "__main__":
    key = jax.random.PRNGKey(0)
    k_x, k_p = jax.random.split(key)

    batch = 8
    input_dim = 32
    bottle_dim = 16

    x = jax.random.normal(k_x, (batch, input_dim), dtype=jnp.float32)
    params = init_params(k_p, input_dim, bottle_dim)

    y, aux = neural_network2_forward(x, params)
    jax.block_until_ready((y, aux))

    y_ref = _reference(x, params)
    assert y.shape == (batch, input_dim)
    assert aux.shape == (1,)
    assert jnp.allclose(y, y_ref, atol=1e-4, rtol=1e-4)

    print("KERNEL_OK")
</pallas_src>

<mosaic_0001>
module attributes {stable_mosaic.version = 11 : i64} {
  func.func @_mlp_kernel(%arg0: i32, %arg1: memref<8x32xf32, #tpu.memory_space<vmem>>, %arg2: memref<32x64xf32, #tpu.memory_space<vmem>>, %arg3: memref<1x64xf32, #tpu.memory_space<vmem>>, %arg4: memref<64x512xf32, #tpu.memory_space<vmem>>, %arg5: memref<1x512xf32, #tpu.memory_space<vmem>>, %arg6: memref<512x16xf32, #tpu.memory_space<vmem>>, %arg7: memref<1x16xf32, #tpu.memory_space<vmem>>, %arg8: memref<16x512xf32, #tpu.memory_space<vmem>>, %arg9: memref<1x512xf32, #tpu.memory_space<vmem>>, %arg10: memref<512x64xf32, #tpu.memory_space<vmem>>, %arg11: memref<1x64xf32, #tpu.memory_space<vmem>>, %arg12: memref<64x32xf32, #tpu.memory_space<vmem>>, %arg13: memref<1x32xf32, #tpu.memory_space<vmem>>, %arg14: memref<8x32xf32, #tpu.memory_space<vmem>>) attributes {dimension_semantics = [#tpu.dimension_semantics<parallel>], iteration_bounds = array<i64: 1>, scalar_prefetch = 0 : i64, scratch_operands = 0 : i64, tpu.core_type = #tpu.core_type<tc>, window_params = [{transform_indices = @transform_0, window_bounds = array<i64: 8, 32>}, {pipeline_mode = #tpu.pipeline_mode<synchronous>, transform_indices = @transform_1, window_bounds = array<i64: 32, 64>}, {pipeline_mode = #tpu.pipeline_mode<synchronous>, transform_indices = @transform_2, window_bounds = array<i64: 1, 64>}, {pipeline_mode = #tpu.pipeline_mode<synchronous>, transform_indices = @transform_3, window_bounds = array<i64: 64, 512>}, {pipeline_mode = #tpu.pipeline_mode<synchronous>, transform_indices = @transform_4, window_bounds = array<i64: 1, 512>}, {pipeline_mode = #tpu.pipeline_mode<synchronous>, transform_indices = @transform_5, window_bounds = array<i64: 512, 16>}, {pipeline_mode = #tpu.pipeline_mode<synchronous>, transform_indices = @transform_6, window_bounds = array<i64: 1, 16>}, {pipeline_mode = #tpu.pipeline_mode<synchronous>, transform_indices = @transform_7, window_bounds = array<i64: 16, 512>}, {pipeline_mode = #tpu.pipeline_mode<synchronous>, transform_indices = @transform_8, window_bounds = array<i64: 1, 512>}, {pipeline_mode = #tpu.pipeline_mode<synchronous>, transform_indices = @transform_9, window_bounds = array<i64: 512, 64>}, {pipeline_mode = #tpu.pipeline_mode<synchronous>, transform_indices = @transform_10, window_bounds = array<i64: 1, 64>}, {pipeline_mode = #tpu.pipeline_mode<synchronous>, transform_indices = @transform_11, window_bounds = array<i64: 64, 32>}, {pipeline_mode = #tpu.pipeline_mode<synchronous>, transform_indices = @transform_12, window_bounds = array<i64: 1, 32>}, {transform_indices = @transform_13, window_bounds = array<i64: 8, 32>}]} {
    %c0 = arith.constant 0 : index
    %c0_0 = arith.constant 0 : index
    %0 = vector.load %arg1[%c0, %c0_0] : memref<8x32xf32, #tpu.memory_space<vmem>>, vector<8x32xf32>
    %c0_1 = arith.constant 0 : index
    %c0_2 = arith.constant 0 : index
    %1 = vector.load %arg2[%c0_1, %c0_2] : memref<32x64xf32, #tpu.memory_space<vmem>>, vector<32x64xf32>
    %cst = arith.constant dense<0.000000e+00> : vector<8x64xf32>
    %2 = tpu.matmul %0, %1, %cst {dimension_numbers = #tpu.dot_dimension_numbers<[1], [0], [0], [1], [0, 0, 1, 1], [], []>} : vector<8x32xf32>, vector<32x64xf32>, vector<8x64xf32> -> vector<8x64xf32>
    %c0_3 = arith.constant 0 : index
    %c0_4 = arith.constant 0 : index
    %3 = vector.load %arg3[%c0_3, %c0_4] : memref<1x64xf32, #tpu.memory_space<vmem>>, vector<1x64xf32>
    %4 = vector.broadcast %3 : vector<1x64xf32> to vector<8x64xf32>
    %5 = arith.addf %2, %4 : vector<8x64xf32>
    %cst_5 = arith.constant 0.000000e+00 : f32
    %6 = vector.broadcast %cst_5 : f32 to vector<8x64xf32>
    %7 = arith.maximumf %5, %6 : vector<8x64xf32>
    %c0_6 = arith.constant 0 : index
    %c0_7 = arith.constant 0 : index
    %8 = vector.load %arg4[%c0_6, %c0_7] : memref<64x512xf32, #tpu.memory_space<vmem>>, vector<64x512xf32>
    %cst_8 = arith.constant dense<0.000000e+00> : vector<8x512xf32>
    %9 = tpu.matmul %7, %8, %cst_8 {dimension_numbers = #tpu.dot_dimension_numbers<[1], [0], [0], [1], [0, 0, 1, 1], [], []>} : vector<8x64xf32>, vector<64x512xf32>, vector<8x512xf32> -> vector<8x512xf32>
    %c0_9 = arith.constant 0 : index
    %c0_10 = arith.constant 0 : index
    %10 = vector.load %arg5[%c0_9, %c0_10] : memref<1x512xf32, #tpu.memory_space<vmem>>, vector<1x512xf32>
    %11 = vector.broadcast %10 : vector<1x512xf32> to vector<8x512xf32>
    %12 = arith.addf %9, %11 : vector<8x512xf32>
    %cst_11 = arith.constant 0.000000e+00 : f32
    %13 = vector.broadcast %cst_11 : f32 to vector<8x512xf32>
    %14 = arith.maximumf %12, %13 : vector<8x512xf32>
    %c0_12 = arith.constant 0 : index
    %c0_13 = arith.constant 0 : index
    %15 = vector.load %arg6[%c0_12, %c0_13] : memref<512x16xf32, #tpu.memory_space<vmem>>, vector<512x16xf32>
    %cst_14 = arith.constant dense<0.000000e+00> : vector<8x16xf32>
    %16 = tpu.matmul %14, %15, %cst_14 {dimension_numbers = #tpu.dot_dimension_numbers<[1], [0], [0], [1], [0, 0, 1, 1], [], []>} : vector<8x512xf32>, vector<512x16xf32>, vector<8x16xf32> -> vector<8x16xf32>
    %c0_15 = arith.constant 0 : index
    %c0_16 = arith.constant 0 : index
    %17 = vector.load %arg7[%c0_15, %c0_16] : memref<1x16xf32, #tpu.memory_space<vmem>>, vector<1x16xf32>
    %18 = vector.broadcast %17 : vector<1x16xf32> to vector<8x16xf32>
    %19 = arith.addf %16, %18 : vector<8x16xf32>
    %cst_17 = arith.constant 0.000000e+00 : f32
    %20 = vector.broadcast %cst_17 : f32 to vector<8x16xf32>
    %21 = arith.maximumf %19, %20 : vector<8x16xf32>
    %c0_18 = arith.constant 0 : index
    %c0_19 = arith.constant 0 : index
    %22 = vector.load %arg8[%c0_18, %c0_19] : memref<16x512xf32, #tpu.memory_space<vmem>>, vector<16x512xf32>
    %cst_20 = arith.constant dense<0.000000e+00> : vector<8x512xf32>
    %23 = tpu.matmul %21, %22, %cst_20 {dimension_numbers = #tpu.dot_dimension_numbers<[1], [0], [0], [1], [0, 0, 1, 1], [], []>} : vector<8x16xf32>, vector<16x512xf32>, vector<8x512xf32> -> vector<8x512xf32>
    %c0_21 = arith.constant 0 : index
    %c0_22 = arith.constant 0 : index
    %24 = vector.load %arg9[%c0_21, %c0_22] : memref<1x512xf32, #tpu.memory_space<vmem>>, vector<1x512xf32>
    %25 = vector.broadcast %24 : vector<1x512xf32> to vector<8x512xf32>
    %26 = arith.addf %23, %25 : vector<8x512xf32>
    %cst_23 = arith.constant 0.000000e+00 : f32
    %27 = vector.broadcast %cst_23 : f32 to vector<8x512xf32>
    %28 = arith.maximumf %26, %27 : vector<8x512xf32>
    %c0_24 = arith.constant 0 : index
    %c0_25 = arith.constant 0 : index
    %29 = vector.load %arg10[%c0_24, %c0_25] : memref<512x64xf32, #tpu.memory_space<vmem>>, vector<512x64xf32>
    %cst_26 = arith.constant dense<0.000000e+00> : vector<8x64xf32>
    %30 = tpu.matmul %28, %29, %cst_26 {dimension_numbers = #tpu.dot_dimension_numbers<[1], [0], [0], [1], [0, 0, 1, 1], [], []>} : vector<8x512xf32>, vector<512x64xf32>, vector<8x64xf32> -> vector<8x64xf32>
    %c0_27 = arith.constant 0 : index
    %c0_28 = arith.constant 0 : index
    %31 = vector.load %arg11[%c0_27, %c0_28] : memref<1x64xf32, #tpu.memory_space<vmem>>, vector<1x64xf32>
    %32 = vector.broadcast %31 : vector<1x64xf32> to vector<8x64xf32>
    %33 = arith.addf %30, %32 : vector<8x64xf32>
    %cst_29 = arith.constant 0.000000e+00 : f32
    %34 = vector.broadcast %cst_29 : f32 to vector<8x64xf32>
    %35 = arith.maximumf %33, %34 : vector<8x64xf32>
    %c0_30 = arith.constant 0 : index
    %c0_31 = arith.constant 0 : index
    %36 = vector.load %arg12[%c0_30, %c0_31] : memref<64x32xf32, #tpu.memory_space<vmem>>, vector<64x32xf32>
    %cst_32 = arith.constant dense<0.000000e+00> : vector<8x32xf32>
    %37 = tpu.matmul %35, %36, %cst_32 {dimension_numbers = #tpu.dot_dimension_numbers<[1], [0], [0], [1], [0, 0, 1, 1], [], []>} : vector<8x64xf32>, vector<64x32xf32>, vector<8x32xf32> -> vector<8x32xf32>
    %c0_33 = arith.constant 0 : index
    %c0_34 = arith.constant 0 : index
    %38 = vector.load %arg13[%c0_33, %c0_34] : memref<1x32xf32, #tpu.memory_space<vmem>>, vector<1x32xf32>
    %39 = vector.broadcast %38 : vector<1x32xf32> to vector<8x32xf32>
    %40 = arith.addf %37, %39 : vector<8x32xf32>
    %c0_35 = arith.constant 0 : index
    %c0_36 = arith.constant 0 : index
    %41 = vector.load %arg14[%c0_35, %c0_36] : memref<8x32xf32, #tpu.memory_space<vmem>>, vector<8x32xf32>
    tpu.vector_store %arg14[%c0_35, %c0_36], %40 {strides = array<i32>} : memref<8x32xf32, #tpu.memory_space<vmem>>, vector<8x32xf32>,
    return
  }
  func.func @transform_0(%arg0: i32) -> (i32, i32) {
    %c0_i32 = arith.constant 0 : i32
    %c0_i32_0 = arith.constant 0 : i32
    return %arg0, %c0_i32 : i32, i32
  }
  func.func @transform_1(%arg0: i32) -> (i32, i32) {
    %c0_i32 = arith.constant 0 : i32
    %c0_i32_0 = arith.constant 0 : i32
    %c0_i32_1 = arith.constant 0 : i32
    return %c0_i32, %c0_i32_0 : i32, i32
  }
  func.func @transform_2(%arg0: i32) -> (i32, i32) {
    %c0_i32 = arith.constant 0 : i32
    %c0_i32_0 = arith.constant 0 : i32
    %c0_i32_1 = arith.constant 0 : i32
    return %c0_i32, %c0_i32_0 : i32, i32
  }
  func.func @transform_3(%arg0: i32) -> (i32, i32) {
    %c0_i32 = arith.constant 0 : i32
    %c0_i32_0 = arith.constant 0 : i32
    %c0_i32_1 = arith.constant 0 : i32
    return %c0_i32, %c0_i32_0 : i32, i32
  }
  func.func @transform_4(%arg0: i32) -> (i32, i32) {
    %c0_i32 = arith.constant 0 : i32
    %c0_i32_0 = arith.constant 0 : i32
    %c0_i32_1 = arith.constant 0 : i32
    return %c0_i32, %c0_i32_0 : i32, i32
  }
  func.func @transform_5(%arg0: i32) -> (i32, i32) {
    %c0_i32 = arith.constant 0 : i32
    %c0_i32_0 = arith.constant 0 : i32
    %c0_i32_1 = arith.constant 0 : i32
    return %c0_i32, %c0_i32_0 : i32, i32
  }
  func.func @transform_6(%arg0: i32) -> (i32, i32) {
    %c0_i32 = arith.constant 0 : i32
    %c0_i32_0 = arith.constant 0 : i32
    %c0_i32_1 = arith.constant 0 : i32
    return %c0_i32, %c0_i32_0 : i32, i32
  }
  func.func @transform_7(%arg0: i32) -> (i32, i32) {
    %c0_i32 = arith.constant 0 : i32
    %c0_i32_0 = arith.constant 0 : i32
    %c0_i32_1 = arith.constant 0 : i32
    return %c0_i32, %c0_i32_0 : i32, i32
  }
  func.func @transform_8(%arg0: i32) -> (i32, i32) {
    %c0_i32 = arith.constant 0 : i32
    %c0_i32_0 = arith.constant 0 : i32
    %c0_i32_1 = arith.constant 0 : i32
    return %c0_i32, %c0_i32_0 : i32, i32
  }
  func.func @transform_9(%arg0: i32) -> (i32, i32) {
    %c0_i32 = arith.constant 0 : i32
    %c0_i32_0 = arith.constant 0 : i32
    %c0_i32_1 = arith.constant 0 : i32
    return %c0_i32, %c0_i32_0 : i32, i32
  }
  func.func @transform_10(%arg0: i32) -> (i32, i32) {
    %c0_i32 = arith.constant 0 : i32
    %c0_i32_0 = arith.constant 0 : i32
    %c0_i32_1 = arith.constant 0 : i32
    return %c0_i32, %c0_i32_0 : i32, i32
  }
  func.func @transform_11(%arg0: i32) -> (i32, i32) {
    %c0_i32 = arith.constant 0 : i32
    %c0_i32_0 = arith.constant 0 : i32
    %c0_i32_1 = arith.constant 0 : i32
    return %c0_i32, %c0_i32_0 : i32, i32
  }
  func.func @transform_12(%arg0: i32) -> (i32, i32) {
    %c0_i32 = arith.constant 0 : i32
    %c0_i32_0 = arith.constant 0 : i32
    %c0_i32_1 = arith.constant 0 : i32
    return %c0_i32, %c0_i32_0 : i32, i32
  }
  func.func @transform_13(%arg0: i32) -> (i32, i32) {
    %c0_i32 = arith.constant 0 : i32
    %c0_i32_0 = arith.constant 0 : i32
    return %arg0, %c0_i32 : i32, i32
  }
}

</mosaic_0001>

<llo_original>
// kernel: tpu_custom_call.1
$region0: #{tpu_custom_call.1}
  #allocation0 [shape = 'u32[]', space=smem, size = 0x4, offset = 0x4, fixed_abs, tag = 'smem constant byte address 0x4 - core index']
  #allocation1 [shape = 'u32[72,128]{1,0:T(1,128)}', space=vmem, size = 0x9000, scoped, tag = 'internal scratch']
  %s0 = inlined_call_operand.vmem [shape: f32[8,32], index: 0, kind: input, shape index: {}]
  %s1 = inlined_call_operand.vmem [shape: f32[32,64], index: 1, kind: input, shape index: {}]
  %s2 = inlined_call_operand.vmem [shape: f32[1,64], index: 2, kind: input, shape index: {}]
  %s3 = inlined_call_operand.vmem [shape: f32[64,512], index: 3, kind: input, shape index: {}]
  %s4 = inlined_call_operand.vmem [shape: f32[1,512], index: 4, kind: input, shape index: {}]
  %s5 = inlined_call_operand.vmem [shape: f32[512,16], index: 5, kind: input, shape index: {}]
  %s6 = inlined_call_operand.vmem [shape: f32[1,16], index: 6, kind: input, shape index: {}]
  %s7 = inlined_call_operand.vmem [shape: f32[16,512], index: 7, kind: input, shape index: {}]
  %s8 = inlined_call_operand.vmem [shape: f32[1,512], index: 8, kind: input, shape index: {}]
  %s9 = inlined_call_operand.vmem [shape: f32[512,64], index: 9, kind: input, shape index: {}]
  %s10 = inlined_call_operand.vmem [shape: f32[1,64], index: 10, kind: input, shape index: {}]
  %s11 = inlined_call_operand.vmem [shape: f32[64,32], index: 11, kind: input, shape index: {}]
  %s12 = inlined_call_operand.vmem [shape: f32[1,32], index: 12, kind: input, shape index: {}]
  %s13 = inlined_call_operand.hbm [shape: f32[8,32], index: 13, kind: output, shape index: {}]
  %s14 = sld [smem:[#allocation0]]
  $region62: #{tpu_custom_call.1} parent=0
    _
  %s16 = ssub.s32 1, %s14
  %s17 = scalar_select 0, %s16, %s14
  $region1: #{tpu_custom_call.1} parent=0
    #allocation2 [shape = 'u8[4096]{0}', space=vmem, size = 0x1000, scoped, tag = 'output window, operand 0, single buffered']
    #allocation3 [shape = 's32[1]{0}', space=sflag, size = 0x4, scoped, tag = 'scoped memory for tpu_custom_call.1']
    %18 = vsyncpa [#allocation3], 0
    // Predicated region
    $region2: #{tpu_custom_call.1} parent=1 // pred_check
      _
    $region3: #{tpu_custom_call.1} parent=1 // pred_check_branch
      %20 = sbr.rel (0) target = $region5
    $region4: #{tpu_custom_call.1} parent=1 // pred_region
      _
    $region5: #{tpu_custom_call.1} parent=1 // pred_fallthru
      _
    // Predicated region
    $region6: #{tpu_custom_call.1} parent=1 // pred_check
      _
    $region7: #{tpu_custom_call.1} parent=1 // pred_check_branch
      %22 = sbr.rel (0) target = $region9
    $region8: #{tpu_custom_call.1} parent=1 // pred_region
      _
    $region9: #{tpu_custom_call.1} parent=1 // pred_fallthru
      _
    // Predicated region
    $region10: #{tpu_custom_call.1} parent=1 // pred_check
      _
    $region11: #{tpu_custom_call.1} parent=1 // pred_check_branch
      %24 = sbr.rel (0) target = $region13
    $region12: #{tpu_custom_call.1} parent=1 // pred_region
      _
    $region13: #{tpu_custom_call.1} parent=1 // pred_fallthru
      _
    // Predicated region
    $region14: #{tpu_custom_call.1} parent=1 // pred_check
      _
    $region15: #{tpu_custom_call.1} parent=1 // pred_check_branch
      %26 = sbr.rel (0) target = $region17
    $region16: #{tpu_custom_call.1} parent=1 // pred_region
      _
    $region17: #{tpu_custom_call.1} parent=1 // pred_fallthru
      _
    // Predicated region
    $region18: #{tpu_custom_call.1} parent=1 // pred_check
      _
    $region19: #{tpu_custom_call.1} parent=1 // pred_check_branch
      %28 = sbr.rel (0) target = $region21
    $region20: #{tpu_custom_call.1} parent=1 // pred_region
      _
    $region21: #{tpu_custom_call.1} parent=1 // pred_fallthru
      _
    // Predicated region
    $region22: #{tpu_custom_call.1} parent=1 // pred_check
      _
    $region23: #{tpu_custom_call.1} parent=1 // pred_check_branch
      %30 = sbr.rel (0) target = $region25
    $region24: #{tpu_custom_call.1} parent=1 // pred_region
      _
    $region25: #{tpu_custom_call.1} parent=1 // pred_fallthru
      _
    // Predicated region
    $region26: #{tpu_custom_call.1} parent=1 // pred_check
      _
    $region27: #{tpu_custom_call.1} parent=1 // pred_check_branch
      %32 = sbr.rel (0) target = $region29
    $region28: #{tpu_custom_call.1} parent=1 // pred_region
      _
    $region29: #{tpu_custom_call.1} parent=1 // pred_fallthru
      _
    // Predicated region
    $region30: #{tpu_custom_call.1} parent=1 // pred_check
      _
    $region31: #{tpu_custom_call.1} parent=1 // pred_check_branch
      %34 = sbr.rel (0) target = $region33
    $region32: #{tpu_custom_call.1} parent=1 // pred_region
      _
    $region33: #{tpu_custom_call.1} parent=1 // pred_fallthru
      _
    // Predicated region
    $region34: #{tpu_custom_call.1} parent=1 // pred_check
      _
    $region35: #{tpu_custom_call.1} parent=1 // pred_check_branch
      %36 = sbr.rel (0) target = $region37
    $region36: #{tpu_custom_call.1} parent=1 // pred_region
      _
    $region37: #{tpu_custom_call.1} parent=1 // pred_fallthru
      _
    // Predicated region
    $region38: #{tpu_custom_call.1} parent=1 // pred_check
      _
    $region39: #{tpu_custom_call.1} parent=1 // pred_check_branch
      %38 = sbr.rel (0) target = $region41
    $region40: #{tpu_custom_call.1} parent=1 // pred_region
      _
    $region41: #{tpu_custom_call.1} parent=1 // pred_fallthru
      _
    // Predicated region
    $region42: #{tpu_custom_call.1} parent=1 // pred_check
      _
    $region43: #{tpu_custom_call.1} parent=1 // pred_check_branch
      %40 = sbr.rel (0) target = $region45
    $region44: #{tpu_custom_call.1} parent=1 // pred_region
      _
    $region45: #{tpu_custom_call.1} parent=1 // pred_fallthru
      _
    // Predicated region
    $region46: #{tpu_custom_call.1} parent=1 // pred_check
      _
    $region47: #{tpu_custom_call.1} parent=1 // pred_check_branch
      %42 = sbr.rel (0) target = $region49
    $region48: #{tpu_custom_call.1} parent=1 // pred_region
      _
    $region49: #{tpu_custom_call.1} parent=1 // pred_fallthru
      _
    // Predicated region
    $region50: #{tpu_custom_call.1} parent=1 // pred_check
      _
    $region51: #{tpu_custom_call.1} parent=1 // pred_check_branch
      %44 = sbr.rel (0) target = $region53
    $region52: #{tpu_custom_call.1} parent=1 // pred_region
      _
    $region53: #{tpu_custom_call.1} parent=1 // pred_fallthru
      _
    %v45 = vld [vmem:[%s0] sm:$0xff]
    %v46 = vld [vmem:[%s1] sm:$0xff]
    %v47 = vld [vmem:[%s1 + $0x8] sm:$0xff]
    %v48 = vld [vmem:[%s1 + $0x10] sm:$0xff]
    %v49 = vld [vmem:[%s1 + $0x18] sm:$0xff]
    %v50 = vld [vmem:[%s2] sm:$0x1]
    %v52 = vperm.slane %v50, 0
    %vm54 = vcmask 261120
    %v56 = vsel %vm54, %v45, 0
    %58 = vmatpush.msra.mxu0 0.0
    %59 = vmatpush.msra.mxu0 0.0
    %60 = vmatpush.msra.mxu0 0.0
    %61 = vmatpush.msra.mxu0 0.0
    %62 = vmatpush.msra.mxu0 0.0
    %63 = vmatpush.msra.mxu0 0.0
    %64 = vmatpush.msra.mxu0 0.0
    %65 = vmatpush.msra.mxu0 0.0
    %66 = vmatpush.msra.mxu0 0.0
    %67 = vmatpush.msra.mxu0 0.0
    %68 = vmatpush.msra.mxu0 0.0
    %69 = vmatpush.msra.mxu0 0.0
    %70 = vmatpush.msra.mxu0 %v49
    %71 = vmatpush.msra.mxu0 %v48
    %72 = vmatpush.msra.mxu0 %v47
    %73 = vmatpush.msra.mxu0 %v46
    %74 = vmatmul.f32.gmra.mxu0 %v56
    %v75 = vpop.f32.mrf.mxu0
    %v76 = vadd.f32 %v52, %v75
    %77 = vdwg.mxu0
    %v78 = vmax.f32 %v76, 0.0
    %v79 = vld [vmem:[%s3] sm:$0xff]
    %v80 = vld [vmem:[%s3 + $0x8] sm:$0xff]
    %v81 = vld [vmem:[%s3 + $0x10] sm:$0xff]
    %v82 = vld [vmem:[%s3 + $0x18] sm:$0xff]
    %v83 = vld [vmem:[%s3 + $0x20] sm:$0xff]
    %v84 = vld [vmem:[%s3 + $0x28] sm:$0xff]
    %v85 = vld [vmem:[%s3 + $0x30] sm:$0xff]
    %v86 = vld [vmem:[%s3 + $0x38] sm:$0xff]
    %v87 = vld [vmem:[%s3 + $0x40] sm:$0xff]
    %v88 = vld [vmem:[%s3 + $0x48] sm:$0xff]
    %v89 = vld [vmem:[%s3 + $0x50] sm:$0xff]
    %v90 = vld [vmem:[%s3 + $0x58] sm:$0xff]
    %v91 = vld [vmem:[%s3 + $0x60] sm:$0xff]
    %v92 = vld [vmem:[%s3 + $0x68] sm:$0xff]
    %v93 = vld [vmem:[%s3 + $0x70] sm:$0xff]
    %v94 = vld [vmem:[%s3 + $0x78] sm:$0xff]
    %v95 = vld [vmem:[%s3 + $0x80] sm:$0xff]
    %v96 = vld [vmem:[%s3 + $0x88] sm:$0xff]
    %v97 = vld [vmem:[%s3 + $0x90] sm:$0xff]
    %v98 = vld [vmem:[%s3 + $0x98] sm:$0xff]
    %v99 = vld [vmem:[%s3 + $0xa0] sm:$0xff]
    %v100 = vld [vmem:[%s3 + $0xa8] sm:$0xff]
    %v101 = vld [vmem:[%s3 + $0xb0] sm:$0xff]
    %v102 = vld [vmem:[%s3 + $0xb8] sm:$0xff]
    %v103 = vld [vmem:[%s3 + $0xc0] sm:$0xff]
    %v104 = vld [vmem:[%s3 + $0xc8] sm:$0xff]
    %v105 = vld [vmem:[%s3 + $0xd0] sm:$0xff]
    %v106 = vld [vmem:[%s3 + $0xd8] sm:$0xff]
    %v107 = vld [vmem:[%s3 + $0xe0] sm:$0xff]
    %v108 = vld [vmem:[%s3 + $0xe8] sm:$0xff]
    %v109 = vld [vmem:[%s3 + $0xf0] sm:$0xff]
    %v110 = vld [vmem:[%s3 + $0xf8] sm:$0xff]
    %v111 = vld [vmem:[%s4] sm:$0xf]
    %v113 = vperm.slane %v111, 0
    %v114 = vperm.slane %v111, 1
    %v115 = vperm.slane %v111, 2
    %v116 = vperm.slane %v111, 3
    %vm121 = vcmask 523264
    %v123 = vsel %vm121, %v78, 0
    %125 = vmatpush.msra.mxu0 0.0
    %126 = vmatpush.msra.mxu0 0.0
    %127 = vmatpush.msra.mxu0 0.0
    %128 = vmatpush.msra.mxu0 0.0
    %129 = vmatpush.msra.mxu0 0.0
    %130 = vmatpush.msra.mxu0 0.0
    %131 = vmatpush.msra.mxu0 0.0
    %132 = vmatpush.msra.mxu0 0.0
    %133 = vmatpush.msra.mxu0 %v107
    %134 = vmatpush.msra.mxu0 %v103
    %135 = vmatpush.msra.mxu0 %v99
    %136 = vmatpush.msra.mxu0 %v95
    %137 = vmatpush.msra.mxu0 %v91
    %138 = vmatpush.msra.mxu0 %v87
    %139 = vmatpush.msra.mxu0 %v83
    %140 = vmatpush.msra.mxu0 %v79
    %141 = vmatmul.f32.gmra.mxu0 %v123
    %v142 = vpop.f32.mrf.mxu0
    %v143 = vadd.f32 %v113, %v142
    %144 = vdwg.mxu0
    %145 = vmatpush.msra.mxu0 0.0
    %146 = vmatpush.msra.mxu0 0.0
    %147 = vmatpush.msra.mxu0 0.0
    %148 = vmatpush.msra.mxu0 0.0
    %149 = vmatpush.msra.mxu0 0.0
    %150 = vmatpush.msra.mxu0 0.0
    %151 = vmatpush.msra.mxu0 0.0
    %152 = vmatpush.msra.mxu0 0.0
    %153 = vmatpush.msra.mxu0 %v108
    %154 = vmatpush.msra.mxu0 %v104
    %155 = vmatpush.msra.mxu0 %v100
    %156 = vmatpush.msra.mxu0 %v96
    %157 = vmatpush.msra.mxu0 %v92
    %158 = vmatpush.msra.mxu0 %v88
    %159 = vmatpush.msra.mxu0 %v84
    %160 = vmatpush.msra.mxu0 %v80
    %161 = vmatmul.f32.gmra.mxu0 %v123
    %v162 = vpop.f32.mrf.mxu0
    %v163 = vadd.f32 %v114, %v162
    %164 = vdwg.mxu0
    %165 = vmatpush.msra.mxu0 0.0
    %166 = vmatpush.msra.mxu0 0.0
    %167 = vmatpush.msra.mxu0 0.0
    %168 = vmatpush.msra.mxu0 0.0
    %169 = vmatpush.msra.mxu0 0.0
    %170 = vmatpush.msra.mxu0 0.0
    %171 = vmatpush.msra.mxu0 0.0
    %172 = vmatpush.msra.mxu0 0.0
    %173 = vmatpush.msra.mxu0 %v109
    %174 = vmatpush.msra.mxu0 %v105
    %175 = vmatpush.msra.mxu0 %v101
    %176 = vmatpush.msra.mxu0 %v97
    %177 = vmatpush.msra.mxu0 %v93
    %178 = vmatpush.msra.mxu0 %v89
    %179 = vmatpush.msra.mxu0 %v85
    %180 = vmatpush.msra.mxu0 %v81
    %181 = vmatmul.f32.gmra.mxu0 %v123
    %v182 = vpop.f32.mrf.mxu0
    %v183 = vadd.f32 %v115, %v182
    %184 = vdwg.mxu0
    %185 = vmatpush.msra.mxu0 0.0
    %186 = vmatpush.msra.mxu0 0.0
    %187 = vmatpush.msra.mxu0 0.0
    %188 = vmatpush.msra.mxu0 0.0
    %189 = vmatpush.msra.mxu0 0.0
    %190 = vmatpush.msra.mxu0 0.0
    %191 = vmatpush.msra.mxu0 0.0
    %192 = vmatpush.msra.mxu0 0.0
    %193 = vmatpush.msra.mxu0 %v110
    %194 = vmatpush.msra.mxu0 %v106
    %195 = vmatpush.msra.mxu0 %v102
    %196 = vmatpush.msra.mxu0 %v98
    %197 = vmatpush.msra.mxu0 %v94
    %198 = vmatpush.msra.mxu0 %v90
    %199 = vmatpush.msra.mxu0 %v86
    %200 = vmatpush.msra.mxu0 %v82
    %201 = vmatmul.f32.gmra.mxu0 %v123
    %v202 = vpop.f32.mrf.mxu0
    %v203 = vadd.f32 %v116, %v202
    %204 = vdwg.mxu0
    %v205 = vmax.f32 %v143, 0.0
    %v206 = vmax.f32 %v163, 0.0
    %v207 = vmax.f32 %v183, 0.0
    %v208 = vmax.f32 %v203, 0.0
    %v209 = vld [vmem:[%s5] sm:$0xff]
    %v210 = vld [vmem:[%s5 + $0x8] sm:$0xff]
    %v211 = vld [vmem:[%s5 + $0x10] sm:$0xff]
    %v212 = vld [vmem:[%s5 + $0x18] sm:$0xff]
    %v213 = vld [vmem:[%s5 + $0x20] sm:$0xff]
    %v214 = vld [vmem:[%s5 + $0x28] sm:$0xff]
    %v215 = vld [vmem:[%s5 + $0x30] sm:$0xff]
    %v216 = vld [vmem:[%s5 + $0x38] sm:$0xff]
    %v217 = vld [vmem:[%s5 + $0x40] sm:$0xff]
    %v218 = vld [vmem:[%s5 + $0x48] sm:$0xff]
    %v219 = vld [vmem:[%s5 + $0x50] sm:$0xff]
    %v220 = vld [vmem:[%s5 + $0x58] sm:$0xff]
    %v221 = vld [vmem:[%s5 + $0x60] sm:$0xff]
    %v222 = vld [vmem:[%s5 + $0x68] sm:$0xff]
    %v223 = vld [vmem:[%s5 + $0x70] sm:$0xff]
    %v224 = vld [vmem:[%s5 + $0x78] sm:$0xff]
    %v225 = vld [vmem:[%s5 + $0x80] sm:$0xff]
    %v226 = vld [vmem:[%s5 + $0x88] sm:$0xff]
    %v227 = vld [vmem:[%s5 + $0x90] sm:$0xff]
    %v228 = vld [vmem:[%s5 + $0x98] sm:$0xff]
    %v229 = vld [vmem:[%s5 + $0xa0] sm:$0xff]
    %v230 = vld [vmem:[%s5 + $0xa8] sm:$0xff]
    %v231 = vld [vmem:[%s5 + $0xb0] sm:$0xff]
    %v232 = vld [vmem:[%s5 + $0xb8] sm:$0xff]
    %v233 = vld [vmem:[%s5 + $0xc0] sm:$0xff]
    %v234 = vld [vmem:[%s5 + $0xc8] sm:$0xff]
    %v235 = vld [vmem:[%s5 + $0xd0] sm:$0xff]
    %v236 = vld [vmem:[%s5 + $0xd8] sm:$0xff]
    %v237 = vld [vmem:[%s5 + $0xe0] sm:$0xff]
    %v238 = vld [vmem:[%s5 + $0xe8] sm:$0xff]
    %v239 = vld [vmem:[%s5 + $0xf0] sm:$0xff]
    %v240 = vld [vmem:[%s5 + $0xf8] sm:$0xff]
    %v241 = vld [vmem:[%s5 + $0x100] sm:$0xff]
    %v242 = vld [vmem:[%s5 + $0x108] sm:$0xff]
    %v243 = vld [vmem:[%s5 + $0x110] sm:$0xff]
    %v244 = vld [vmem:[%s5 + $0x118] sm:$0xff]
    %v245 = vld [vmem:[%s5 + $0x120] sm:$0xff]
    %v246 = vld [vmem:[%s5 + $0x128] sm:$0xff]
    %v247 = vld [vmem:[%s5 + $0x130] sm:$0xff]
    %v248 = vld [vmem:[%s5 + $0x138] sm:$0xff]
    %v249 = vld [vmem:[%s5 + $0x140] sm:$0xff]
    %v250 = vld [vmem:[%s5 + $0x148] sm:$0xff]
    %v251 = vld [vmem:[%s5 + $0x150] sm:$0xff]
    %v252 = vld [vmem:[%s5 + $0x158] sm:$0xff]
    %v253 = vld [vmem:[%s5 + $0x160] sm:$0xff]
    %v254 = vld [vmem:[%s5 + $0x168] sm:$0xff]
    %v255 = vld [vmem:[%s5 + $0x170] sm:$0xff]
    %v256 = vld [vmem:[%s5 + $0x178] sm:$0xff]
    %v257 = vld [vmem:[%s5 + $0x180] sm:$0xff]
    %v258 = vld [vmem:[%s5 + $0x188] sm:$0xff]
    %v259 = vld [vmem:[%s5 + $0x190] sm:$0xff]
    %v260 = vld [vmem:[%s5 + $0x198] sm:$0xff]
    %v261 = vld [vmem:[%s5 + $0x1a0] sm:$0xff]
    %v262 = vld [vmem:[%s5 + $0x1a8] sm:$0xff]
    %v263 = vld [vmem:[%s5 + $0x1b0] sm:$0xff]
    %v264 = vld [vmem:[%s5 + $0x1b8] sm:$0xff]
    %v265 = vld [vmem:[%s5 + $0x1c0] sm:$0xff]
    %v266 = vld [vmem:[%s5 + $0x1c8] sm:$0xff]
    %v267 = vld [vmem:[%s5 + $0x1d0] sm:$0xff]
    %v268 = vld [vmem:[%s5 + $0x1d8] sm:$0xff]
    %v269 = vld [vmem:[%s5 + $0x1e0] sm:$0xff]
    %v270 = vld [vmem:[%s5 + $0x1e8] sm:$0xff]
    %v271 = vld [vmem:[%s5 + $0x1f0] sm:$0xff]
    %v272 = vld [vmem:[%s5 + $0x1f8] sm:$0xff]
    %v273 = vld [vmem:[%s6] sm:$0x1]
    %v275 = vperm.slane %v273, 0
    %277 = vmatpush.msra.mxu0 %v224
    %278 = vmatpush.msra.mxu0 %v223
    %279 = vmatpush.msra.mxu0 %v222
    %280 = vmatpush.msra.mxu0 %v221
    %281 = vmatpush.msra.mxu0 %v220
    %282 = vmatpush.msra.mxu0 %v219
    %283 = vmatpush.msra.mxu0 %v218
    %284 = vmatpush.msra.mxu0 %v217
    %285 = vmatpush.msra.mxu0 %v216
    %286 = vmatpush.msra.mxu0 %v215
    %287 = vmatpush.msra.mxu0 %v214
    %288 = vmatpush.msra.mxu0 %v213
    %289 = vmatpush.msra.mxu0 %v212
    %290 = vmatpush.msra.mxu0 %v211
    %291 = vmatpush.msra.mxu0 %v210
    %292 = vmatpush.msra.mxu0 %v209
    %293 = vmatmul.f32.gmra.mxu0 %v205
    %v294 = vpop.f32.mrf.mxu0
    %v295 = vadd.f32 %v275, %v294
    %296 = vdwg.mxu0
    %297 = vmatpush.msra.mxu0 %v240
    %298 = vmatpush.msra.mxu0 %v239
    %299 = vmatpush.msra.mxu0 %v238
    %300 = vmatpush.msra.mxu0 %v237
    %301 = vmatpush.msra.mxu0 %v236
    %302 = vmatpush.msra.mxu0 %v235
    %303 = vmatpush.msra.mxu0 %v234
    %304 = vmatpush.msra.mxu0 %v233
    %305 = vmatpush.msra.mxu0 %v232
    %306 = vmatpush.msra.mxu0 %v231
    %307 = vmatpush.msra.mxu0 %v230
    %308 = vmatpush.msra.mxu0 %v229
    %309 = vmatpush.msra.mxu0 %v228
    %310 = vmatpush.msra.mxu0 %v227
    %311 = vmatpush.msra.mxu0 %v226
    %312 = vmatpush.msra.mxu0 %v225
    %313 = vmatmul.f32.gmra.mxu0 %v206
    %v314 = vpop.f32.mrf.mxu0
    %v315 = vadd.f32 %v295, %v314
    %316 = vdwg.mxu0
    %317 = vmatpush.msra.mxu0 %v256
    %318 = vmatpush.msra.mxu0 %v255
    %319 = vmatpush.msra.mxu0 %v254
    %320 = vmatpush.msra.mxu0 %v253
    %321 = vmatpush.msra.mxu0 %v252
    %322 = vmatpush.msra.mxu0 %v251
    %323 = vmatpush.msra.mxu0 %v250
    %324 = vmatpush.msra.mxu0 %v249
    %325 = vmatpush.msra.mxu0 %v248
    %326 = vmatpush.msra.mxu0 %v247
    %327 = vmatpush.msra.mxu0 %v246
    %328 = vmatpush.msra.mxu0 %v245
    %329 = vmatpush.msra.mxu0 %v244
    %330 = vmatpush.msra.mxu0 %v243
    %331 = vmatpush.msra.mxu0 %v242
    %332 = vmatpush.msra.mxu0 %v241
    %333 = vmatmul.f32.gmra.mxu0 %v207
    %v334 = vpop.f32.mrf.mxu0
    %v335 = vadd.f32 %v315, %v334
    %336 = vdwg.mxu0
    %337 = vmatpush.msra.mxu0 %v272
    %338 = vmatpush.msra.mxu0 %v271
    %339 = vmatpush.msra.mxu0 %v270
    %340 = vmatpush.msra.mxu0 %v269
    %341 = vmatpush.msra.mxu0 %v268
    %342 = vmatpush.msra.mxu0 %v267
    %343 = vmatpush.msra.mxu0 %v266
    %344 = vmatpush.msra.mxu0 %v265
    %345 = vmatpush.msra.mxu0 %v264
    %346 = vmatpush.msra.mxu0 %v263
    %347 = vmatpush.msra.mxu0 %v262
    %348 = vmatpush.msra.mxu0 %v261
    %349 = vmatpush.msra.mxu0 %v260
    %350 = vmatpush.msra.mxu0 %v259
    %351 = vmatpush.msra.mxu0 %v258
    %352 = vmatpush.msra.mxu0 %v257
    %353 = vmatmul.f32.gmra.mxu0 %v208
    %v354 = vpop.f32.mrf.mxu0
    %v355 = vadd.f32 %v335, %v354
    %356 = vdwg.mxu0
    %v357 = vmax.f32 %v355, 0.0
    %v358 = vld [vmem:[%s7] sm:$0xff]
    %v359 = vld [vmem:[%s7 + $0x8] sm:$0xff]
    %v360 = vld [vmem:[%s7 + $0x10] sm:$0xff]
    %v361 = vld [vmem:[%s7 + $0x18] sm:$0xff]
    %v362 = vld [vmem:[%s7 + $0x20] sm:$0xff]
    %v363 = vld [vmem:[%s7 + $0x28] sm:$0xff]
    %v364 = vld [vmem:[%s7 + $0x30] sm:$0xff]
    %v365 = vld [vmem:[%s7 + $0x38] sm:$0xff]
    %v366 = vld [vmem:[%s8] sm:$0xf]
    %v368 = vperm.slane %v366, 0
    %v369 = vperm.slane %v366, 1
    %v370 = vperm.slane %v366, 2
    %v371 = vperm.slane %v366, 3
    %vm376 = vcmask 130048
    %v378 = vsel %vm376, %v357, 0
    %380 = vmatpush.msra.mxu0 0.0
    %381 = vmatpush.msra.mxu0 0.0
    %382 = vmatpush.msra.mxu0 0.0
    %383 = vmatpush.msra.mxu0 0.0
    %384 = vmatpush.msra.mxu0 0.0
    %385 = vmatpush.msra.mxu0 0.0
    %386 = vmatpush.msra.mxu0 0.0
    %387 = vmatpush.msra.mxu0 0.0
    %388 = vmatpush.msra.mxu0 0.0
    %389 = vmatpush.msra.mxu0 0.0
    %390 = vmatpush.msra.mxu0 0.0
    %391 = vmatpush.msra.mxu0 0.0
    %392 = vmatpush.msra.mxu0 0.0
    %393 = vmatpush.msra.mxu0 0.0
    %394 = vmatpush.msra.mxu0 %v362
    %395 = vmatpush.msra.mxu0 %v358
    %396 = vmatmul.f32.gmra.mxu0 %v378
    %v397 = vpop.f32.mrf.mxu0
    %v398 = vadd.f32 %v368, %v397
    %399 = vdwg.mxu0
    %400 = vmatpush.msra.mxu0 0.0
    %401 = vmatpush.msra.mxu0 0.0
    %402 = vmatpush.msra.mxu0 0.0
    %403 = vmatpush.msra.mxu0 0.0
    %404 = vmatpush.msra.mxu0 0.0
    %405 = vmatpush.msra.mxu0 0.0
    %406 = vmatpush.msra.mxu0 0.0
    %407 = vmatpush.msra.mxu0 0.0
    %408 = vmatpush.msra.mxu0 0.0
    %409 = vmatpush.msra.mxu0 0.0
    %410 = vmatpush.msra.mxu0 0.0
    %411 = vmatpush.msra.mxu0 0.0
    %412 = vmatpush.msra.mxu0 0.0
    %413 = vmatpush.msra.mxu0 0.0
    %414 = vmatpush.msra.mxu0 %v363
    %415 = vmatpush.msra.mxu0 %v359
    %416 = vmatmul.f32.gmra.mxu0 %v378
    %v417 = vpop.f32.mrf.mxu0
    %v418 = vadd.f32 %v369, %v417
    %419 = vdwg.mxu0
    %420 = vmatpush.msra.mxu0 0.0
    %421 = vmatpush.msra.mxu0 0.0
    %422 = vmatpush.msra.mxu0 0.0
    %423 = vmatpush.msra.mxu0 0.0
    %424 = vmatpush.msra.mxu0 0.0
    %425 = vmatpush.msra.mxu0 0.0
    %426 = vmatpush.msra.mxu0 0.0
    %427 = vmatpush.msra.mxu0 0.0
    %428 = vmatpush.msra.mxu0 0.0
    %429 = vmatpush.msra.mxu0 0.0
    %430 = vmatpush.msra.mxu0 0.0
    %431 = vmatpush.msra.mxu0 0.0
    %432 = vmatpush.msra.mxu0 0.0
    %433 = vmatpush.msra.mxu0 0.0
    %434 = vmatpush.msra.mxu0 %v364
    %435 = vmatpush.msra.mxu0 %v360
    %436 = vmatmul.f32.gmra.mxu0 %v378
    %v437 = vpop.f32.mrf.mxu0
    %v438 = vadd.f32 %v370, %v437
    %439 = vdwg.mxu0
    %440 = vmatpush.msra.mxu0 0.0
    %441 = vmatpush.msra.mxu0 0.0
    %442 = vmatpush.msra.mxu0 0.0
    %443 = vmatpush.msra.mxu0 0.0
    %444 = vmatpush.msra.mxu0 0.0
    %445 = vmatpush.msra.mxu0 0.0
    %446 = vmatpush.msra.mxu0 0.0
    %447 = vmatpush.msra.mxu0 0.0
    %448 = vmatpush.msra.mxu0 0.0
    %449 = vmatpush.msra.mxu0 0.0
    %450 = vmatpush.msra.mxu0 0.0
    %451 = vmatpush.msra.mxu0 0.0
    %452 = vmatpush.msra.mxu0 0.0
    %453 = vmatpush.msra.mxu0 0.0
    %454 = vmatpush.msra.mxu0 %v365
    %455 = vmatpush.msra.mxu0 %v361
    %456 = vmatmul.f32.gmra.mxu0 %v378
    %v457 = vpop.f32.mrf.mxu0
    %v458 = vadd.f32 %v371, %v457
    %459 = vdwg.mxu0
    %v460 = vmax.f32 %v398, 0.0
    %v461 = vmax.f32 %v418, 0.0
    %v462 = vmax.f32 %v438, 0.0
    %v463 = vmax.f32 %v458, 0.0
    %v464 = vld [vmem:[%s9] sm:$0xff]
    %v465 = vld [vmem:[%s9 + $0x8] sm:$0xff]
    %v466 = vld [vmem:[%s9 + $0x10] sm:$0xff]
    %v467 = vld [vmem:[%s9 + $0x18] sm:$0xff]
    %v468 = vld [vmem:[%s9 + $0x20] sm:$0xff]
    %v469 = vld [vmem:[%s9 + $0x28] sm:$0xff]
    %v470 = vld [vmem:[%s9 + $0x30] sm:$0xff]
    %v471 = vld [vmem:[%s9 + $0x38] sm:$0xff]
    %v472 = vld [vmem:[%s9 + $0x40] sm:$0xff]
    %v473 = vld [vmem:[%s9 + $0x48] sm:$0xff]
    %v474 = vld [vmem:[%s9 + $0x50] sm:$0xff]
    %v475 = vld [vmem:[%s9 + $0x58] sm:$0xff]
    %v476 = vld [vmem:[%s9 + $0x60] sm:$0xff]
    %v477 = vld [vmem:[%s9 + $0x68] sm:$0xff]
    %v478 = vld [vmem:[%s9 + $0x70] sm:$0xff]
    %v479 = vld [vmem:[%s9 + $0x78] sm:$0xff]
    %v480 = vld [vmem:[%s9 + $0x80] sm:$0xff]
    %v481 = vld [vmem:[%s9 + $0x88] sm:$0xff]
    %v482 = vld [vmem:[%s9 + $0x90] sm:$0xff]
    %v483 = vld [vmem:[%s9 + $0x98] sm:$0xff]
    %v484 = vld [vmem:[%s9 + $0xa0] sm:$0xff]
    %v485 = vld [vmem:[%s9 + $0xa8] sm:$0xff]
    %v486 = vld [vmem:[%s9 + $0xb0] sm:$0xff]
    %v487 = vld [vmem:[%s9 + $0xb8] sm:$0xff]
    %v488 = vld [vmem:[%s9 + $0xc0] sm:$0xff]
    %v489 = vld [vmem:[%s9 + $0xc8] sm:$0xff]
    %v490 = vld [vmem:[%s9 + $0xd0] sm:$0xff]
    %v491 = vld [vmem:[%s9 + $0xd8] sm:$0xff]
    %v492 = vld [vmem:[%s9 + $0xe0] sm:$0xff]
    %v493 = vld [vmem:[%s9 + $0xe8] sm:$0xff]
    %v494 = vld [vmem:[%s9 + $0xf0] sm:$0xff]
    %v495 = vld [vmem:[%s9 + $0xf8] sm:$0xff]
    %v496 = vld [vmem:[%s9 + $0x100] sm:$0xff]
    %v497 = vld [vmem:[%s9 + $0x108] sm:$0xff]
    %v498 = vld [vmem:[%s9 + $0x110] sm:$0xff]
    %v499 = vld [vmem:[%s9 + $0x118] sm:$0xff]
    %v500 = vld [vmem:[%s9 + $0x120] sm:$0xff]
    %v501 = vld [vmem:[%s9 + $0x128] sm:$0xff]
    %v502 = vld [vmem:[%s9 + $0x130] sm:$0xff]
    %v503 = vld [vmem:[%s9 + $0x138] sm:$0xff]
    %v504 = vld [vmem:[%s9 + $0x140] sm:$0xff]
    %v505 = vld [vmem:[%s9 + $0x148] sm:$0xff]
    %v506 = vld [vmem:[%s9 + $0x150] sm:$0xff]
    %v507 = vld [vmem:[%s9 + $0x158] sm:$0xff]
    %v508 = vld [vmem:[%s9 + $0x160] sm:$0xff]
    %v509 = vld [vmem:[%s9 + $0x168] sm:$0xff]
    %v510 = vld [vmem:[%s9 + $0x170] sm:$0xff]
    %v511 = vld [vmem:[%s9 + $0x178] sm:$0xff]
    %v512 = vld [vmem:[%s9 + $0x180] sm:$0xff]
    %v513 = vld [vmem:[%s9 + $0x188] sm:$0xff]
    %v514 = vld [vmem:[%s9 + $0x190] sm:$0xff]
    %v515 = vld [vmem:[%s9 + $0x198] sm:$0xff]
    %v516 = vld [vmem:[%s9 + $0x1a0] sm:$0xff]
    %v517 = vld [vmem:[%s9 + $0x1a8] sm:$0xff]
    %v518 = vld [vmem:[%s9 + $0x1b0] sm:$0xff]
    %v519 = vld [vmem:[%s9 + $0x1b8] sm:$0xff]
    %v520 = vld [vmem:[%s9 + $0x1c0] sm:$0xff]
    %v521 = vld [vmem:[%s9 + $0x1c8] sm:$0xff]
    %v522 = vld [vmem:[%s9 + $0x1d0] sm:$0xff]
    %v523 = vld [vmem:[%s9 + $0x1d8] sm:$0xff]
    %v524 = vld [vmem:[%s9 + $0x1e0] sm:$0xff]
    %v525 = vld [vmem:[%s9 + $0x1e8] sm:$0xff]
    %v526 = vld [vmem:[%s9 + $0x1f0] sm:$0xff]
    %v527 = vld [vmem:[%s9 + $0x1f8] sm:$0xff]
    %v528 = vld [vmem:[%s10] sm:$0x1]
    %v530 = vperm.slane %v528, 0
    %532 = vmatpush.msra.mxu0 %v479
    %533 = vmatpush.msra.mxu0 %v478
    %534 = vmatpush.msra.mxu0 %v477
    %535 = vmatpush.msra.mxu0 %v476
    %536 = vmatpush.msra.mxu0 %v475
    %537 = vmatpush.msra.mxu0 %v474
    %538 = vmatpush.msra.mxu0 %v473
    %539 = vmatpush.msra.mxu0 %v472
    %540 = vmatpush.msra.mxu0 %v471
    %541 = vmatpush.msra.mxu0 %v470
    %542 = vmatpush.msra.mxu0 %v469
    %543 = vmatpush.msra.mxu0 %v468
    %544 = vmatpush.msra.mxu0 %v467
    %545 = vmatpush.msra.mxu0 %v466
    %546 = vmatpush.msra.mxu0 %v465
    %547 = vmatpush.msra.mxu0 %v464
    %548 = vmatmul.f32.gmra.mxu0 %v460
    %v549 = vpop.f32.mrf.mxu0
    %v550 = vadd.f32 %v530, %v549
    %551 = vdwg.mxu0
    %552 = vmatpush.msra.mxu0 %v495
    %553 = vmatpush.msra.mxu0 %v494
    %554 = vmatpush.msra.mxu0 %v493
    %555 = vmatpush.msra.mxu0 %v492
    %556 = vmatpush.msra.mxu0 %v491
    %557 = vmatpush.msra.mxu0 %v490
    %558 = vmatpush.msra.mxu0 %v489
    %559 = vmatpush.msra.mxu0 %v488
    %560 = vmatpush.msra.mxu0 %v487
    %561 = vmatpush.msra.mxu0 %v486
    %562 = vmatpush.msra.mxu0 %v485
    %563 = vmatpush.msra.mxu0 %v484
    %564 = vmatpush.msra.mxu0 %v483
    %565 = vmatpush.msra.mxu0 %v482
    %566 = vmatpush.msra.mxu0 %v481
    %567 = vmatpush.msra.mxu0 %v480
    %568 = vmatmul.f32.gmra.mxu0 %v461
    %v569 = vpop.f32.mrf.mxu0
    %v570 = vadd.f32 %v550, %v569
    %571 = vdwg.mxu0
    %572 = vmatpush.msra.mxu0 %v511
    %573 = vmatpush.msra.mxu0 %v510
    %574 = vmatpush.msra.mxu0 %v509
    %575 = vmatpush.msra.mxu0 %v508
    %576 = vmatpush.msra.mxu0 %v507
    %577 = vmatpush.msra.mxu0 %v506
    %578 = vmatpush.msra.mxu0 %v505
    %579 = vmatpush.msra.mxu0 %v504
    %580 = vmatpush.msra.mxu0 %v503
    %581 = vmatpush.msra.mxu0 %v502
    %582 = vmatpush.msra.mxu0 %v501
    %583 = vmatpush.msra.mxu0 %v500
    %584 = vmatpush.msra.mxu0 %v499
    %585 = vmatpush.msra.mxu0 %v498
    %586 = vmatpush.msra.mxu0 %v497
    %587 = vmatpush.msra.mxu0 %v496
    %588 = vmatmul.f32.gmra.mxu0 %v462
    %v589 = vpop.f32.mrf.mxu0
    %v590 = vadd.f32 %v570, %v589
    %591 = vdwg.mxu0
    %592 = vmatpush.msra.mxu0 %v527
    %593 = vmatpush.msra.mxu0 %v526
    %594 = vmatpush.msra.mxu0 %v525
    %595 = vmatpush.msra.mxu0 %v524
    %596 = vmatpush.msra.mxu0 %v523
    %597 = vmatpush.msra.mxu0 %v522
    %598 = vmatpush.msra.mxu0 %v521
    %599 = vmatpush.msra.mxu0 %v520
    %600 = vmatpush.msra.mxu0 %v519
    %601 = vmatpush.msra.mxu0 %v518
    %602 = vmatpush.msra.mxu0 %v517
    %603 = vmatpush.msra.mxu0 %v516
    %604 = vmatpush.msra.mxu0 %v515
    %605 = vmatpush.msra.mxu0 %v514
    %606 = vmatpush.msra.mxu0 %v513
    %607 = vmatpush.msra.mxu0 %v512
    %608 = vmatmul.f32.gmra.mxu0 %v463
    %v609 = vpop.f32.mrf.mxu0
    %v610 = vadd.f32 %v590, %v609
    %611 = vdwg.mxu0
    %v612 = vmax.f32 %v610, 0.0
    %v613 = vld [vmem:[%s11] sm:$0xff]
    %v614 = vld [vmem:[%s11 + $0x8] sm:$0xff]
    %v615 = vld [vmem:[%s11 + $0x10] sm:$0xff]
    %v616 = vld [vmem:[%s11 + $0x18] sm:$0xff]
    %v617 = vld [vmem:[%s11 + $0x20] sm:$0xff]
    %v618 = vld [vmem:[%s11 + $0x28] sm:$0xff]
    %v619 = vld [vmem:[%s11 + $0x30] sm:$0xff]
    %v620 = vld [vmem:[%s11 + $0x38] sm:$0xff]
    %v621 = vld [vmem:[%s12] sm:$0x1]
    %v623 = vperm.slane %v621, 0
    %v626 = vsel %vm121, %v612, 0
    %628 = vmatpush.msra.mxu0 0.0
    %629 = vmatpush.msra.mxu0 0.0
    %630 = vmatpush.msra.mxu0 0.0
    %631 = vmatpush.msra.mxu0 0.0
    %632 = vmatpush.msra.mxu0 0.0
    %633 = vmatpush.msra.mxu0 0.0
    %634 = vmatpush.msra.mxu0 0.0
    %635 = vmatpush.msra.mxu0 0.0
    %636 = vmatpush.msra.mxu0 %v620
    %637 = vmatpush.msra.mxu0 %v619
    %638 = vmatpush.msra.mxu0 %v618
    %639 = vmatpush.msra.mxu0 %v617
    %640 = vmatpush.msra.mxu0 %v616
    %641 = vmatpush.msra.mxu0 %v615
    %642 = vmatpush.msra.mxu0 %v614
    %643 = vmatpush.msra.mxu0 %v613
    %644 = vmatmul.f32.gmra.mxu0 %v626
    %v645 = vpop.f32.mrf.mxu0
    %v646 = vadd.f32 %v623, %v645
    %647 = vdwg.mxu0
    %648 = vst.msk [vmem:[#allocation2] sm:$0xff] %vm54, %v646
    // Predicated region
    $region54: #{tpu_custom_call.1} parent=1 // pred_check
      _
    $region55: #{tpu_custom_call.1} parent=1 // pred_check_branch
      %650 = sbr.rel (0) target = $region57
    $region56: #{tpu_custom_call.1} parent=1 // pred_region
      %652 = vsyncadd [#allocation3], 0
      %s654 = sshll.u32 [#allocation2], 4
      %s655 = int_to_ptr.vmem [resolvable:$true] %s654
      %s656 = sshll.u32 %s13, 4
      %s657 = int_to_ptr.hbm [resolvable:$true] %s656
      %659 = dma.vmem_to_hbm [thread:$0]  %s655, 128, %s657, [#allocation3]
    $region57: #{tpu_custom_call.1} parent=1 // pred_fallthru
      _
    // Predicated region
    $region58: #{tpu_custom_call.1} parent=1 // pred_check
      _
    $region59: #{tpu_custom_call.1} parent=1 // pred_check_branch
      %661 = sbr.rel (0) target = $region61
    $region60: #{tpu_custom_call.1} parent=1 // pred_region
      %663 = dma.done [#allocation3], 128
    $region61: #{tpu_custom_call.1} parent=1 // pred_fallthru
      _
    %664 = vsyncpa [#allocation3], 1

</llo_original>
